<compile_context>
chip_gen: v6e
topology: v6e:2x2x1
jax: 0.10.0
libtpu: 0.0.40
codegen_flags: <defaults>
</compile_context>

<pallas_src>
import functools

import jax
import jax.numpy as jnp
from jax import lax
from jax.experimental import pallas as pl
from jax.experimental.pallas import tpu as pltpu


def _tpu_vmem_capacity_bytes():
    """Physical VMEM capacity (128 MiB v5e/v6e, 64 MiB per-TC v7x); safe fallback."""
    try:
        info = pltpu.get_tpu_info()
        cap = getattr(info, "vmem_capacity_bytes", None)
        if cap:
            return int(cap)
    except Exception:
        pass
    return 64 * 1024 * 1024  # conservative (v7x-sized) fallback


def _stce_kernel(x_ref, t_ref, out_ref, *, tile_n, n_rows, use_mxu_reduce):
    i = pl.program_id(0)

    x = x_ref[...].astype(jnp.float32)           # (tile_n, C)
    t = t_ref[...].astype(jnp.float32)           # (tile_n, C)
    c = x.shape[-1]

    if use_mxu_reduce:
        # Lane-axis reductions on the otherwise-idle MXU (v7x + bf16 inputs):
        # every column of (v @ ones) equals the row sum; keep column 0.
        ones_cols = jnp.ones((c, 128), dtype=jnp.float32)

        def row_sum(v):
            r = jnp.dot(v, ones_cols, preferred_element_type=jnp.float32)
            return r[:, 0:1]
    else:
        def row_sum(v):
            return jnp.sum(v, axis=-1, keepdims=True)

    # Numerically stable log-sum-exp along the lane (class) axis.
    m = jnp.max(x, axis=-1, keepdims=True)                      # (tile_n, 1)
    xm = x - m                                                  # (tile_n, C)
    lse = jnp.log(row_sum(jnp.exp(xm)))                         # (tile_n, 1)

    # Folded weighted sum without catastrophic cancellation:
    #   sum(-t * log_softmax(x)) = sum(t) * lse - sum(t * (x - m))
    s_t = row_sum(t)                                            # (tile_n, 1)
    s_txm = row_sum(t * xm)                                     # (tile_n, 1)
    # Exact divide (not approx reciprocal) to stay well inside tolerance.
    row_loss = (s_t * lse - s_txm) / (s_t + 1e-6)               # (tile_n, 1)

    # Mask rows of the last partial tile BEFORE the cross-row reduction, so
    # Inf/NaN from uninitialised rows cannot poison the tile sum.
    row_idx = i * tile_n + lax.broadcasted_iota(jnp.int32, (tile_n, 1), 0)
    row_loss = jnp.where(row_idx < n_rows, row_loss, 0.0)

    tile_sum = jnp.sum(row_loss)                                # scalar partial sum

    # Lane-dense (8, 128) output block; only [0, 0] carries the value so the
    # wrapper-side jnp.sum over all partial blocks stays exact.
    r8 = lax.broadcasted_iota(jnp.int32, (8, 128), 0)
    c128 = lax.broadcasted_iota(jnp.int32, (8, 128), 1)
    out_ref[...] = jnp.where((r8 == 0) & (c128 == 0), tile_sum, 0.0)


def soft_target_cross_entropy(x, target, *, tile_n=None, use_mxu_reduce=False):
    """x, target: [N, C] arrays (f32 or bf16). Returns scalar float32 loss."""
    assert x.shape == target.shape and x.ndim == 2
    n, c = x.shape
    itemsize = max(jnp.dtype(x.dtype).itemsize, jnp.dtype(target.dtype).itemsize)

    vmem_cap = _tpu_vmem_capacity_bytes()

    # Bytes per tile row: double-buffered input DMAs (2 inputs x 2 buffers) plus
    # ~4 f32 in-kernel temps (x_f32, t_f32, exp(xm), t*xm).
    per_row_bytes = c * (4 * itemsize + 4 * 4)

    if tile_n is None:
        budget = vmem_cap // 3          # ~42 MiB on 128 MiB parts, ~21 MiB on v7x
        tile_n = max(8, budget // per_row_bytes)
        tile_n = min(tile_n, 4096)

    # Keep at least 2 tiles when N allows so the "parallel" grid axis can be
    # sharded across both TensorCores on v7x (harmless single extra step on 1-TC chips).
    two_tile_cap = max(8, ((int(pl.cdiv(n, 2)) + 7) // 8) * 8)
    tile_n = min(int(tile_n), two_tile_cap)
    # Round to a sublane multiple, never exceed the (sublane-padded) row count.
    tile_n = max(8, (tile_n // 8) * 8)
    tile_n = min(tile_n, ((n + 7) // 8) * 8)

    num_tiles = int(pl.cdiv(n, tile_n))

    # Scoped-VMEM limit derived from the same estimate (leave generous headroom,
    # never above 3/4 of physical VMEM).
    vmem_limit = int(min(vmem_cap * 3 // 4,
                         max(per_row_bytes * tile_n + (4 << 20), 16 << 20)))

    kernel = functools.partial(_stce_kernel, tile_n=tile_n, n_rows=n,
                               use_mxu_reduce=use_mxu_reduce)

    partial = pl.pallas_call(
        kernel,
        out_shape=jax.ShapeDtypeStruct((num_tiles * 8, 128), jnp.float32),
        grid_spec=pltpu.PrefetchScalarGridSpec(
            num_scalar_prefetch=0,
            grid=(num_tiles,),
            in_specs=[
                pl.BlockSpec((tile_n, c), lambda i: (i, 0)),
                pl.BlockSpec((tile_n, c), lambda i: (i, 0)),
            ],
            # One lane-dense (8,128) partial-sum block per grid step (unmasked vst).
            out_specs=pl.BlockSpec((8, 128), lambda i: (i, 0)),
        ),
        compiler_params=pltpu.CompilerParams(
            # Each tile writes its own output block -> no cross-step dependence,
            # so the row axis is "parallel" (lets v7x shard tiles across both TCs).
            dimension_semantics=("parallel",),
            vmem_limit_bytes=vmem_limit,
        ),
    )(x, target)

    # Each tile contributed exactly one nonzero element (its masked partial sum);
    # mean over the true N rows.
    return jnp.sum(partial) / jnp.float32(n)


def _reference(x, target):
    log_sm = jax.nn.log_softmax(x.astype(jnp.float32), axis=-1)
    t = target.astype(jnp.float32)
    loss = jnp.sum(-t * log_sm, axis=-1) / (jnp.sum(t, axis=-1) + 1e-6)
    return jnp.mean(loss)


if __name__ == "__main__":
    key = jax.random.PRNGKey(0)

    def make_inputs(k, n, c, dtype=jnp.float32):
        k1, k2 = jax.random.split(k)
        x = jax.random.normal(k1, (n, c), dtype=jnp.float32).astype(dtype)
        t = jax.nn.softmax(jax.random.normal(k2, (n, c), dtype=jnp.float32),
                           axis=-1).astype(dtype)
        return x, t

    k1, k2, k3, k4, k5 = jax.random.split(key, 5)

    # Case 1: baseline small shape (single tile).
    x, t = make_inputs(k1, 8, 32)
    loss = jax.block_until_ready(soft_target_cross_entropy(x, t))
    ref = jax.block_until_ready(_reference(x, t))
    assert jnp.allclose(loss, ref, rtol=1e-5, atol=1e-5), (loss, ref)

    # Case 2: N not a multiple of the tile (exercises the in-kernel row mask
    # applied before the per-tile partial sum).
    x, t = make_inputs(k2, 13, 32)
    loss = jax.block_until_ready(soft_target_cross_entropy(x, t))
    ref = jax.block_until_ready(_reference(x, t))
    assert jnp.allclose(loss, ref, rtol=1e-5, atol=1e-5), (loss, ref)

    # Case 3: multiple tiles on the "parallel" grid axis (forced small tile_n).
    x, t = make_inputs(k3, 24, 32)
    loss = jax.block_until_ready(soft_target_cross_entropy(x, t, tile_n=8))
    ref = jax.block_until_ready(_reference(x, t))
    assert jnp.allclose(loss, ref, rtol=1e-5, atol=1e-5), (loss, ref)

    # Case 4: MXU-offloaded lane reductions (the v7x-targeted variant).
    x, t = make_inputs(k4, 16, 32)
    loss = jax.block_until_ready(
        soft_target_cross_entropy(x, t, use_mxu_reduce=True))
    ref = jax.block_until_ready(_reference(x, t))
    assert jnp.allclose(loss, ref, rtol=1e-5, atol=1e-5), (loss, ref)

    # Case 5: bf16 inputs (halved HBM traffic; math stays f32 in-kernel).
    x, t = make_inputs(k5, 16, 32, dtype=jnp.bfloat16)
    loss = jax.block_until_ready(soft_target_cross_entropy(x, t))
    ref = jax.block_until_ready(_reference(x, t))
    assert jnp.allclose(loss, ref, rtol=1e-5, atol=1e-5), (loss, ref)

    print("KERNEL_OK")
</pallas_src>

<mosaic_0001>
module attributes {stable_mosaic.version = 11 : i64} {
  func.func @_stce_kernel(%arg0: i32, %arg1: memref<8x32xf32, #tpu.memory_space<vmem>>, %arg2: memref<8x32xf32, #tpu.memory_space<vmem>>, %arg3: memref<8x128xf32, #tpu.memory_space<vmem>>) attributes {dimension_semantics = [#tpu.dimension_semantics<parallel>], iteration_bounds = array<i64: 1>, scalar_prefetch = 0 : i64, scratch_operands = 0 : i64, tpu.core_type = #tpu.core_type<tc>, window_params = [{transform_indices = @transform_0, window_bounds = array<i64: 8, 32>}, {transform_indices = @transform_1, window_bounds = array<i64: 8, 32>}, {transform_indices = @transform_2, window_bounds = array<i64: 8, 128>}]} {
    %c0 = arith.constant 0 : index
    %c0_0 = arith.constant 0 : index
    %0 = vector.load %arg1[%c0, %c0_0] : memref<8x32xf32, #tpu.memory_space<vmem>>, vector<8x32xf32>
    %c0_1 = arith.constant 0 : index
    %c0_2 = arith.constant 0 : index
    %1 = vector.load %arg2[%c0_1, %c0_2] : memref<8x32xf32, #tpu.memory_space<vmem>>, vector<8x32xf32>
    %cst = arith.constant dense<0xFF800000> : vector<8xf32>
    %2 = vector.multi_reduction <maximumf>, %0, %cst [1] : vector<8x32xf32> to vector<8xf32>
    %3 = vector.shape_cast %2 : vector<8xf32> to vector<8x1xf32>
    %4 = vector.broadcast %3 : vector<8x1xf32> to vector<8x32xf32>
    %5 = arith.subf %0, %4 : vector<8x32xf32>
    %6 = math.exp %5 : vector<8x32xf32>
    %cst_3 = arith.constant dense<0.000000e+00> : vector<8xf32>
    %7 = vector.multi_reduction <add>, %6, %cst_3 [1] : vector<8x32xf32> to vector<8xf32>
    %8 = vector.shape_cast %7 : vector<8xf32> to vector<8x1xf32>
    %9 = math.log %8 : vector<8x1xf32>
    %cst_4 = arith.constant dense<0.000000e+00> : vector<8xf32>
    %10 = vector.multi_reduction <add>, %1, %cst_4 [1] : vector<8x32xf32> to vector<8xf32>
    %11 = vector.shape_cast %10 : vector<8xf32> to vector<8x1xf32>
    %12 = arith.mulf %1, %5 : vector<8x32xf32>
    %cst_5 = arith.constant dense<0.000000e+00> : vector<8xf32>
    %13 = vector.multi_reduction <add>, %12, %cst_5 [1] : vector<8x32xf32> to vector<8xf32>
    %14 = vector.shape_cast %13 : vector<8xf32> to vector<8x1xf32>
    %15 = arith.mulf %11, %9 : vector<8x1xf32>
    %16 = arith.subf %15, %14 : vector<8x1xf32>
    %cst_6 = arith.constant 9.99999997E-7 : f32
    %17 = vector.broadcast %cst_6 : f32 to vector<8x1xf32>
    %18 = arith.addf %11, %17 : vector<8x1xf32>
    %19 = arith.divf %16, %18 : vector<8x1xf32>
    %c8_i32 = arith.constant 8 : i32
    %20 = arith.muli %arg0, %c8_i32 : i32
    %21 = tpu.iota {dimensions = array<i32: 0>} : vector<8x1xi32>
    %22 = vector.broadcast %20 : i32 to vector<8x1xi32>
    %23 = arith.addi %22, %21 : vector<8x1xi32>
    %c8_i32_7 = arith.constant 8 : i32
    %24 = vector.broadcast %c8_i32_7 : i32 to vector<8x1xi32>
    %25 = arith.cmpi slt, %23, %24 : vector<8x1xi32>
    %cst_8 = arith.constant 0.000000e+00 : f32
    %26 = vector.broadcast %cst_8 : f32 to vector<8x1xf32>
    %27 = arith.select %25, %19, %26 : vector<8x1xi1>, vector<8x1xf32>
    %28 = vector.shape_cast %27 : vector<8x1xf32> to vector<1x8x1xf32>
    %cst_9 = arith.constant dense<0.000000e+00> : vector<1xf32>
    %29 = vector.multi_reduction <add>, %28, %cst_9 [1, 2] : vector<1x8x1xf32> to vector<1xf32>
    %30 = vector.shape_cast %29 : vector<1xf32> to vector<1x1x1xf32>
    %31 = vector.extract %30[0, 0, 0] : f32 from vector<1x1x1xf32>
    %32 = tpu.iota {dimensions = array<i32: 0>} : vector<8x128xi32>
    %33 = tpu.iota {dimensions = array<i32: 1>} : vector<8x128xi32>
    %c0_i32 = arith.constant 0 : i32
    %34 = vector.broadcast %c0_i32 : i32 to vector<8x128xi32>
    %35 = arith.cmpi eq, %32, %34 : vector<8x128xi32>
    %c0_i32_10 = arith.constant 0 : i32
    %36 = vector.broadcast %c0_i32_10 : i32 to vector<8x128xi32>
    %37 = arith.cmpi eq, %33, %36 : vector<8x128xi32>
    %38 = arith.andi %35, %37 : vector<8x128xi1>
    %cst_11 = arith.constant 0.000000e+00 : f32
    %39 = vector.broadcast %31 : f32 to vector<8x128xf32>
    %40 = vector.broadcast %cst_11 : f32 to vector<8x128xf32>
    %41 = arith.select %38, %39, %40 : vector<8x128xi1>, vector<8x128xf32>
    %c0_12 = arith.constant 0 : index
    %c0_13 = arith.constant 0 : index
    %42 = vector.load %arg3[%c0_12, %c0_13] : memref<8x128xf32, #tpu.memory_space<vmem>>, vector<8x128xf32>
    tpu.vector_store %arg3[%c0_12, %c0_13], %41 {strides = array<i32>} : memref<8x128xf32, #tpu.memory_space<vmem>>, vector<8x128xf32>,
    return
  }
  func.func @transform_0(%arg0: i32) -> (i32, i32) {
    %c0_i32 = arith.constant 0 : i32
    %c0_i32_0 = arith.constant 0 : i32
    return %arg0, %c0_i32 : i32, i32
  }
  func.func @transform_1(%arg0: i32) -> (i32, i32) {
    %c0_i32 = arith.constant 0 : i32
    %c0_i32_0 = arith.constant 0 : i32
    return %arg0, %c0_i32 : i32, i32
  }
  func.func @transform_2(%arg0: i32) -> (i32, i32) {
    %c0_i32 = arith.constant 0 : i32
    %c0_i32_0 = arith.constant 0 : i32
    return %arg0, %c0_i32 : i32, i32
  }
}

</mosaic_0001>

<llo_original>
// kernel: tpu_custom_call.1
$region0: #{tpu_custom_call.1}
  #allocation0 [shape = 'u32[]', space=smem, size = 0x4, offset = 0x4, fixed_abs, tag = 'smem constant byte address 0x4 - core index']
  #allocation1 [shape = 'u32[144,128]{1,0:T(1,128)}', space=vmem, size = 0x12000, scoped, tag = 'internal scratch']
  %s0 = inlined_call_operand.hbm [shape: f32[8,32], index: 0, kind: input, shape index: {}]
  %s1 = inlined_call_operand.hbm [shape: f32[8,32], index: 1, kind: input, shape index: {}]
  %s2 = inlined_call_operand.hbm [shape: f32[8,128], index: 2, kind: output, shape index: {}]
  %s3 = sld [smem:[#allocation0]]
  $region26: #{tpu_custom_call.1} parent=0
    _
  %s5 = ssub.s32 1, %s3
  %s6 = scalar_select 0, %s5, %s3
  $region1: #{tpu_custom_call.1} parent=0
    #allocation2 [shape = 'u8[4096]{0}', space=vmem, size = 0x1000, scoped, tag = 'input window, operand 0, single buffered']
    #allocation3 [shape = 's32[1]{0}', space=sflag, size = 0x4, scoped, tag = 'scoped memory for tpu_custom_call.1']
    #allocation4 [shape = 's32[1]{0}', space=sflag, size = 0x4, scoped, tag = 'scoped memory for tpu_custom_call.1']
    #allocation5 [shape = 'u8[4096]{0}', space=vmem, size = 0x1000, scoped, tag = 'input window, operand 1, single buffered']
    #allocation6 [shape = 's32[1]{0}', space=sflag, size = 0x4, scoped, tag = 'scoped memory for tpu_custom_call.1']
    #allocation7 [shape = 'u8[4096]{0}', space=vmem, size = 0x1000, scoped, tag = 'output window, operand 0, single buffered']
    %7 = vsyncpa [#allocation3], 0
    %8 = vsyncpa [#allocation6], 0
    %9 = vsyncpa [#allocation4], 0
    // Predicated region
    $region2: #{tpu_custom_call.1} parent=1 // pred_check
      _
    $region3: #{tpu_custom_call.1} parent=1 // pred_check_branch
      %11 = sbr.rel (0) target = $region5
    $region4: #{tpu_custom_call.1} parent=1 // pred_region
      %s13 = ssub.s32 128, 128
      %14 = vsyncadd [#allocation3], %s13
      %s16 = sshll.u32 [#allocation2], 4
      %s17 = int_to_ptr.vmem [resolvable:$true] %s16
      %19 = dma.hbm_to_vmem [thread:$0]  %s0, 128, %s17, [#allocation3]
    $region5: #{tpu_custom_call.1} parent=1 // pred_fallthru
      _
    // Predicated region
    $region6: #{tpu_custom_call.1} parent=1 // pred_check
      _
    $region7: #{tpu_custom_call.1} parent=1 // pred_check_branch
      %21 = sbr.rel (0) target = $region9
    $region8: #{tpu_custom_call.1} parent=1 // pred_region
      %s23 = ssub.s32 128, 128
      %24 = vsyncadd [#allocation6], %s23
      %s26 = sshll.u32 [#allocation5], 4
      %s27 = int_to_ptr.vmem [resolvable:$true] %s26
      %29 = dma.hbm_to_vmem [thread:$0]  %s1, 128, %s27, [#allocation6]
    $region9: #{tpu_custom_call.1} parent=1 // pred_fallthru
      _
    // Predicated region
    $region10: #{tpu_custom_call.1} parent=1 // pred_check
      _
    $region11: #{tpu_custom_call.1} parent=1 // pred_check_branch
      %31 = sbr.rel (0) target = $region13
    $region12: #{tpu_custom_call.1} parent=1 // pred_region
      %32 = dma.done [#allocation3], 128
    $region13: #{tpu_custom_call.1} parent=1 // pred_fallthru
      _
    // Predicated region
    $region14: #{tpu_custom_call.1} parent=1 // pred_check
      _
    $region15: #{tpu_custom_call.1} parent=1 // pred_check_branch
      %34 = sbr.rel (0) target = $region17
    $region16: #{tpu_custom_call.1} parent=1 // pred_region
      %35 = dma.done [#allocation6], 128
    $region17: #{tpu_custom_call.1} parent=1 // pred_fallthru
      _
    %v36 = vld [vmem:[#allocation2] sm:$0xff]
    %v37 = vld [vmem:[#allocation5] sm:$0xff]
    %vm38 = vcmask 261120
    %v39 = vsel %vm38, %v36, -inf
    %40 = vmax.xlane.f32.xlu0 %v39
    %v41 = vpop.xlane.xlu0 %40
    %v42 = vsub.f32 %v36, %v41
    %v43 = vmul.f32 %v42, 1.442695
    %v44 = vpow.pop %v43
    %v45 = vsel %vm38, %v44, 0.0
    %46 = vadd.xlane.f32.xlu0 %v45
    %v47 = vpop.xlane.xlu0 %46
    %v48 = vlog2.pop %v47
    %v49 = vmul.f32 %v48, 0.6931472
    %v50 = vsel %vm38, %v37, 0.0
    %51 = vadd.xlane.f32.xlu0 %v50
    %v52 = vpop.xlane.xlu0 %51
    %v53 = vmul.f32 %v37, %v42
    %v54 = vsel %vm38, %v53, 0.0
    %55 = vadd.xlane.f32.xlu0 %v54
    %v56 = vpop.xlane.xlu0 %55
    %v57 = vmul.f32 %v52, %v49
    %v58 = vsub.f32 %v57, %v56
    %v59 = vadd.f32 %v52, 1e-06
    %v60 = vrcp.pop %v59
    %v61 = vmul.f32 %v58, %v60
    %s62 = smul.u32 0, 8
    %v63 = vlaneseq
    %v64 = vshrl.u32 %v63, 7
    %v65 = vstv %s62
    %v66 = vadd.s32 %v65, %v64
    %vm67 = vcmp.lt.s32.totalorder %v66, 8
    %v68 = vsel %vm67, %v61, 0.0
    %vm69 = vcmask 7168
    %v70 = vsel %vm69, %v68, 0.0
    %71 = vadd.xlane.f32.xlu0 %v70
    %v72 = vpop.xlane.xlu0 %71
    %v73 = vrot.slane %v72, 4
    %v74 = vadd.f32 %v72, %v73
    %v75 = vrot.slane %v74, 2
    %v76 = vadd.f32 %v74, %v75
    %v77 = vrot.slane %v76, 1
    %v78 = vadd.f32 %v76, %v77
    %s79 = vtos %v78
    %v80 = vlaneseq
    %v81 = vand.u32 %v80, 127
    %vm82 = vcmp.eq.s32.totalorder %v64, 0
    %vm83 = vcmp.eq.s32.totalorder %v81, 0
    %vm84 = vmand %vm82, %vm83
    %v85 = vstv %s79
    %v86 = vsel %vm84, %v85, 0.0
    %87 = vst [vmem:[#allocation7] sm:$0xff] %v86
    // Predicated region
    $region18: #{tpu_custom_call.1} parent=1 // pred_check
      _
    $region19: #{tpu_custom_call.1} parent=1 // pred_check_branch
      %89 = sbr.rel (0) target = $region21
    $region20: #{tpu_custom_call.1} parent=1 // pred_region
      %s91 = ssub.s32 128, 128
      %92 = vsyncadd [#allocation4], %s91
      %s94 = sshll.u32 [#allocation7], 4
      %s95 = int_to_ptr.vmem [resolvable:$true] %s94
      %97 = dma.vmem_to_hbm [thread:$0]  %s95, 128, %s2, [#allocation4]
    $region21: #{tpu_custom_call.1} parent=1 // pred_fallthru
      _
    // Predicated region
    $region22: #{tpu_custom_call.1} parent=1 // pred_check
      _
    $region23: #{tpu_custom_call.1} parent=1 // pred_check_branch
      %99 = sbr.rel (0) target = $region25
    $region24: #{tpu_custom_call.1} parent=1 // pred_region
      %100 = dma.done [#allocation4], 128
    $region25: #{tpu_custom_call.1} parent=1 // pred_fallthru
      _
    %101 = vsyncpa [#allocation3], 1
    %102 = vsyncpa [#allocation6], 1
    %103 = vsyncpa [#allocation4], 1

</llo_original>
